<compile_context>
chip_gen: v6e
topology: v6e:2x2x1
jax: 0.10.0
libtpu: 0.0.40
codegen_flags: <defaults>
</compile_context>

<pallas_src>
import math
from functools import partial

import jax
import jax.numpy as jnp
from jax import lax
from jax.experimental import pallas as pl
from jax.experimental.pallas import tpu as pltpu


def _round_up(x, m):
    return (x + m - 1) // m * m


def _pick_tile(s, max_tile=128):
    """Largest divisor of s that is <= max_tile and sublane-friendly.

    Falls back to the full dimension (always a legal block shape)."""
    for t in range(min(s, max_tile), 0, -1):
        if s % t == 0 and (t % 8 == 0 or t == s):
            return t
    return s


def _flash_attention_head_kernel(q_in_ref, k_in_ref, v_in_ref,
                                 wq_ref, bq_ref, wk_ref, bk_ref, wv_ref, bv_ref,
                                 out_ref,
                                 q_proj_ref, m_ref, l_ref, acc_ref,
                                 *, scale):
    """Grid = (batch, q_tile, kv_tile); kv_tile is the (sequential) reduction axis.

    q_in_ref            : (1, TQ, D_in)
    k_in_ref / v_in_ref : (1, TK, D_in)
    wq_ref              : (D_in, Dqp), bq_ref: (1, Dqp)
    wk_ref / wv_ref     : (D_in, Dkp), bk_ref/bv_ref: (1, Dkp)
    out_ref             : (1, TQ, Dkp)
    scratch: q_proj (TQ, Dqp), m/l (TQ, 1), acc (TQ, Dkp)   all f32
    """
    ki = pl.program_id(2)

    @pl.when(ki == 0)
    def _init():
        # Project the Q tile once per (batch, q_tile).  The 1/sqrt(d_k) score
        # scale is folded in here so the inner kv loop never rescales scores.
        q_proj_ref[...] = (
            jnp.dot(q_in_ref[0], wq_ref[...], preferred_element_type=jnp.float32)
            + bq_ref[...]) * scale
        m_ref[...] = jnp.full_like(m_ref, -jnp.inf)
        l_ref[...] = jnp.zeros_like(l_ref)
        acc_ref[...] = jnp.zeros_like(acc_ref)

    # Project this K/V tile (f32 accumulation on the MXU).
    k = jnp.dot(k_in_ref[0], wk_ref[...], preferred_element_type=jnp.float32) + bk_ref[...]
    v = jnp.dot(v_in_ref[0], wv_ref[...], preferred_element_type=jnp.float32) + bv_ref[...]

    q = q_proj_ref[...]
    # scores = (q * scale) @ k^T, contracting the last dim of both operands so
    # no transpose of k is ever materialized (scale already folded into q).
    s = lax.dot_general(q, k, dimension_numbers=(((1,), (1,)), ((), ())),
                        preferred_element_type=jnp.float32)

    # Online (flash) softmax update.
    m_new = jnp.maximum(m_ref[...], jnp.max(s, axis=-1, keepdims=True))
    alpha = jnp.exp(m_ref[...] - m_new)
    p = jnp.exp(s - m_new)
    l_ref[...] = alpha * l_ref[...] + jnp.sum(p, axis=-1, keepdims=True)
    acc_ref[...] = alpha * acc_ref[...] + jnp.dot(
        p.astype(v.dtype), v, preferred_element_type=jnp.float32)
    m_ref[...] = m_new

    @pl.when(ki == pl.num_programs(2) - 1)
    def _finalize():
        inv_l = pl.reciprocal(l_ref[...], approx=True)   # EUP slot, ~free
        out_ref[0] = (acc_ref[...] * inv_l).astype(out_ref.dtype)


def attention_head(query, key, value, params, *, max_tile=128):
    """query/key/value: (B, S, D_in).  params: torch-style Linear weights/biases."""
    B, S, D_in = query.shape

    # Torch Linear weights are (D_out, D_in); transpose to (D_in, D_out) and
    # zero-pad the output feature dims to a lane-dense multiple of 128.
    wq = params["wq"].T
    wk = params["wk"].T
    wv = params["wv"].T
    Dq, Dk = wq.shape[1], wk.shape[1]
    Dqp, Dkp = _round_up(Dq, 128), _round_up(Dk, 128)

    def pad_w(w, to):
        return jnp.pad(w, ((0, 0), (0, to - w.shape[1])))

    def pad_b(b, to):
        b = b.reshape(1, -1)
        return jnp.pad(b, ((0, 0), (0, to - b.shape[1])))

    wq_p, bq_p = pad_w(wq, Dqp), pad_b(params["bq"], Dqp)
    wk_p, bk_p = pad_w(wk, Dkp), pad_b(params["bk"], Dkp)
    wv_p, bv_p = pad_w(wv, Dkp), pad_b(params["bv"], Dkp)

    TQ = _pick_tile(S, max_tile)
    TK = _pick_tile(S, max_tile)
    nq, nk = S // TQ, S // TK
    grid = (B, nq, nk)

    def full2d(shape):
        return pl.BlockSpec(shape, lambda b, qi, ki: (0, 0))

    in_specs = [
        pl.BlockSpec((1, TQ, D_in), lambda b, qi, ki: (b, qi, 0)),   # query
        pl.BlockSpec((1, TK, D_in), lambda b, qi, ki: (b, ki, 0)),   # key
        pl.BlockSpec((1, TK, D_in), lambda b, qi, ki: (b, ki, 0)),   # value
        full2d((D_in, Dqp)), full2d((1, Dqp)),                        # wq, bq
        full2d((D_in, Dkp)), full2d((1, Dkp)),                        # wk, bk
        full2d((D_in, Dkp)), full2d((1, Dkp)),                        # wv, bv
    ]
    out_specs = pl.BlockSpec((1, TQ, Dkp), lambda b, qi, ki: (b, qi, 0))

    scratch_shapes = [
        pltpu.VMEM((TQ, Dqp), jnp.float32),   # projected (pre-scaled) q tile
        pltpu.VMEM((TQ, 1), jnp.float32),     # running max m
        pltpu.VMEM((TQ, 1), jnp.float32),     # running denom l
        pltpu.VMEM((TQ, Dkp), jnp.float32),   # running output accumulator
    ]

    # Advisory cost hint for XLA's scheduler.
    itemsize = jnp.dtype(query.dtype).itemsize
    flops = int(2 * B * S * D_in * (Dqp + 2 * Dkp) + 2 * B * S * S * (Dqp + Dkp))
    transcendentals = int(B * S * S)
    bytes_accessed = int(itemsize * (3 * B * S * D_in + B * S * Dkp
                                     + D_in * (Dqp + 2 * Dkp) + (Dqp + 2 * Dkp)))
    cost = pl.CostEstimate(flops=flops, transcendentals=transcendentals,
                           bytes_accessed=bytes_accessed)

    out_padded = pl.pallas_call(
        partial(_flash_attention_head_kernel, scale=1.0 / math.sqrt(Dq)),
        out_shape=jax.ShapeDtypeStruct((B, S, Dkp), query.dtype),
        grid_spec=pltpu.PrefetchScalarGridSpec(
            num_scalar_prefetch=0,
            grid=grid,
            in_specs=in_specs,
            out_specs=out_specs,
            scratch_shapes=scratch_shapes),
        compiler_params=pltpu.CompilerParams(
            dimension_semantics=("parallel", "parallel", "arbitrary"),
            # Sized under v7x's 64 MiB physical VMEM; generous for v5e/v6e.
            vmem_limit_bytes=48 * 1024 * 1024),
        cost_estimate=cost,
    )(query, key, value, wq_p, bq_p, wk_p, bk_p, wv_p, bv_p)

    # Strip the lane padding of the output feature dim (glue, done in XLA).
    return out_padded[:, :, :Dk]


def _reference(query, key, value, params):
    """Pure-JAX reference mirroring the PyTorch module."""
    q = query @ params["wq"].T + params["bq"]
    k = key @ params["wk"].T + params["bk"]
    v = value @ params["wv"].T + params["bv"]
    d_k = q.shape[-1]
    scores = (q @ jnp.swapaxes(k, -2, -1)) / math.sqrt(d_k)
    p = jax.nn.softmax(scores, axis=-1)
    return p @ v


if __name__ == "__main__":
    # Small, module-consistent shapes.
    B, S, D_in = 2, 8, 32
    dim_q = dim_k = 16   # must match for q @ k^T, as in the PyTorch module

    key0 = jax.random.PRNGKey(0)
    ks = jax.random.split(key0, 9)

    query = jax.random.normal(ks[0], (B, S, D_in), dtype=jnp.float32)
    key_in = jax.random.normal(ks[1], (B, S, D_in), dtype=jnp.float32)
    value = jax.random.normal(ks[2], (B, S, D_in), dtype=jnp.float32)

    # Torch-Linear-shaped parameters: weight (D_out, D_in), bias (D_out,)
    scale = 1.0 / math.sqrt(D_in)
    params = {
        "wq": jax.random.uniform(ks[3], (dim_q, D_in), minval=-scale, maxval=scale),
        "bq": jax.random.uniform(ks[4], (dim_q,), minval=-scale, maxval=scale),
        "wk": jax.random.uniform(ks[5], (dim_k, D_in), minval=-scale, maxval=scale),
        "bk": jax.random.uniform(ks[6], (dim_k,), minval=-scale, maxval=scale),
        "wv": jax.random.uniform(ks[7], (dim_k, D_in), minval=-scale, maxval=scale),
        "bv": jax.random.uniform(ks[8], (dim_k,), minval=-scale, maxval=scale),
    }

    out = attention_head(query, key_in, value, params)
    out = jax.block_until_ready(out)

    ref = _reference(query, key_in, value, params)
    assert out.shape == (B, S, dim_k), out.shape
    # approx=True reciprocal -> slightly looser tolerance than bit-exact f32.
    assert jnp.allclose(out, ref, atol=2e-3, rtol=2e-3), (
        f"max err {jnp.max(jnp.abs(out - ref))}")

    print("KERNEL_OK")
</pallas_src>

<mosaic_0001>
module attributes {stable_mosaic.version = 11 : i64} {
  func.func @_flash_attention_head_kernel(%arg0: i32, %arg1: i32, %arg2: i32, %arg3: memref<1x8x32xf32, #tpu.memory_space<vmem>>, %arg4: memref<1x8x32xf32, #tpu.memory_space<vmem>>, %arg5: memref<1x8x32xf32, #tpu.memory_space<vmem>>, %arg6: memref<32x128xf32, #tpu.memory_space<vmem>>, %arg7: memref<1x128xf32, #tpu.memory_space<vmem>>, %arg8: memref<32x128xf32, #tpu.memory_space<vmem>>, %arg9: memref<1x128xf32, #tpu.memory_space<vmem>>, %arg10: memref<32x128xf32, #tpu.memory_space<vmem>>, %arg11: memref<1x128xf32, #tpu.memory_space<vmem>>, %arg12: memref<1x8x128xf32, #tpu.memory_space<vmem>>, %arg13: memref<8x128xf32, #tpu.memory_space<vmem>>, %arg14: memref<8x1xf32, #tpu.memory_space<vmem>>, %arg15: memref<8x1xf32, #tpu.memory_space<vmem>>, %arg16: memref<8x128xf32, #tpu.memory_space<vmem>>) attributes {dimension_semantics = [#tpu.dimension_semantics<parallel>, #tpu.dimension_semantics<parallel>, #tpu.dimension_semantics<arbitrary>], iteration_bounds = array<i64: 2, 1, 1>, scalar_prefetch = 0 : i64, scratch_operands = 4 : i64, tpu.core_type = #tpu.core_type<tc>, window_params = [{transform_indices = @transform_0, window_bounds = array<i64: 1, 8, 32>}, {transform_indices = @transform_1, window_bounds = array<i64: 1, 8, 32>}, {transform_indices = @transform_2, window_bounds = array<i64: 1, 8, 32>}, {pipeline_mode = #tpu.pipeline_mode<synchronous>, transform_indices = @transform_3, window_bounds = array<i64: 32, 128>}, {pipeline_mode = #tpu.pipeline_mode<synchronous>, transform_indices = @transform_4, window_bounds = array<i64: 1, 128>}, {pipeline_mode = #tpu.pipeline_mode<synchronous>, transform_indices = @transform_5, window_bounds = array<i64: 32, 128>}, {pipeline_mode = #tpu.pipeline_mode<synchronous>, transform_indices = @transform_6, window_bounds = array<i64: 1, 128>}, {pipeline_mode = #tpu.pipeline_mode<synchronous>, transform_indices = @transform_7, window_bounds = array<i64: 32, 128>}, {pipeline_mode = #tpu.pipeline_mode<synchronous>, transform_indices = @transform_8, window_bounds = array<i64: 1, 128>}, {transform_indices = @transform_9, window_bounds = array<i64: 1, 8, 128>}]} {
    %c0_i32 = arith.constant 0 : i32
    %0 = arith.cmpi eq, %arg2, %c0_i32 : i32
    %1 = arith.extui %0 : i1 to i32
    %c0_i32_0 = arith.constant 0 : i32
    %2 = arith.cmpi ne, %1, %c0_i32_0 : i32
    scf.if %2 {
      %c0_37 = arith.constant 0 : index
      %c0_38 = arith.constant 0 : index
      %c0_39 = arith.constant 0 : index
      %45 = vector.load %arg3[%c0_37, %c0_38, %c0_39] : memref<1x8x32xf32, #tpu.memory_space<vmem>>, vector<1x8x32xf32>
      %46 = vector.shape_cast %45 : vector<1x8x32xf32> to vector<8x32xf32>
      %c0_40 = arith.constant 0 : index
      %c0_41 = arith.constant 0 : index
      %47 = vector.load %arg6[%c0_40, %c0_41] : memref<32x128xf32, #tpu.memory_space<vmem>>, vector<32x128xf32>
      %cst_42 = arith.constant dense<0.000000e+00> : vector<8x128xf32>
      %48 = tpu.matmul %46, %47, %cst_42 {dimension_numbers = #tpu.dot_dimension_numbers<[1], [0], [0], [1], [0, 0, 1, 1], [], []>} : vector<8x32xf32>, vector<32x128xf32>, vector<8x128xf32> -> vector<8x128xf32>
      %c0_43 = arith.constant 0 : index
      %c0_44 = arith.constant 0 : index
      %49 = vector.load %arg7[%c0_43, %c0_44] : memref<1x128xf32, #tpu.memory_space<vmem>>, vector<1x128xf32>
      %50 = vector.broadcast %49 : vector<1x128xf32> to vector<8x128xf32>
      %51 = arith.addf %48, %50 : vector<8x128xf32>
      %cst_45 = arith.constant 2.500000e-01 : f32
      %52 = vector.broadcast %cst_45 : f32 to vector<8x128xf32>
      %53 = arith.mulf %51, %52 : vector<8x128xf32>
      %c0_46 = arith.constant 0 : index
      %c0_47 = arith.constant 0 : index
      %54 = vector.load %arg13[%c0_46, %c0_47] : memref<8x128xf32, #tpu.memory_space<vmem>>, vector<8x128xf32>
      tpu.vector_store %arg13[%c0_46, %c0_47], %53 {strides = array<i32>} : memref<8x128xf32, #tpu.memory_space<vmem>>, vector<8x128xf32>,
      %cst_48 = arith.constant 0xFF800000 : f32
      %55 = vector.broadcast %cst_48 : f32 to vector<8x1xf32>
      %c0_49 = arith.constant 0 : index
      %c0_50 = arith.constant 0 : index
      %56 = vector.load %arg14[%c0_49, %c0_50] : memref<8x1xf32, #tpu.memory_space<vmem>>, vector<8x1xf32>
      tpu.vector_store %arg14[%c0_49, %c0_50], %55 {strides = array<i32>} : memref<8x1xf32, #tpu.memory_space<vmem>>, vector<8x1xf32>,
      %cst_51 = arith.constant 0.000000e+00 : f32
      %57 = vector.broadcast %cst_51 : f32 to vector<8x1xf32>
      %c0_52 = arith.constant 0 : index
      %c0_53 = arith.constant 0 : index
      %58 = vector.load %arg15[%c0_52, %c0_53] : memref<8x1xf32, #tpu.memory_space<vmem>>, vector<8x1xf32>
      tpu.vector_store %arg15[%c0_52, %c0_53], %57 {strides = array<i32>} : memref<8x1xf32, #tpu.memory_space<vmem>>, vector<8x1xf32>,
      %cst_54 = arith.constant 0.000000e+00 : f32
      %59 = vector.broadcast %cst_54 : f32 to vector<8x128xf32>
      %c0_55 = arith.constant 0 : index
      %c0_56 = arith.constant 0 : index
      %60 = vector.load %arg16[%c0_55, %c0_56] : memref<8x128xf32, #tpu.memory_space<vmem>>, vector<8x128xf32>
      tpu.vector_store %arg16[%c0_55, %c0_56], %59 {strides = array<i32>} : memref<8x128xf32, #tpu.memory_space<vmem>>, vector<8x128xf32>,
    } else {
    }
    %c0 = arith.constant 0 : index
    %c0_1 = arith.constant 0 : index
    %c0_2 = arith.constant 0 : index
    %3 = vector.load %arg4[%c0, %c0_1, %c0_2] : memref<1x8x32xf32, #tpu.memory_space<vmem>>, vector<1x8x32xf32>
    %4 = vector.shape_cast %3 : vector<1x8x32xf32> to vector<8x32xf32>
    %c0_3 = arith.constant 0 : index
    %c0_4 = arith.constant 0 : index
    %5 = vector.load %arg8[%c0_3, %c0_4] : memref<32x128xf32, #tpu.memory_space<vmem>>, vector<32x128xf32>
    %cst = arith.constant dense<0.000000e+00> : vector<8x128xf32>
    %6 = tpu.matmul %4, %5, %cst {dimension_numbers = #tpu.dot_dimension_numbers<[1], [0], [0], [1], [0, 0, 1, 1], [], []>} : vector<8x32xf32>, vector<32x128xf32>, vector<8x128xf32> -> vector<8x128xf32>
    %c0_5 = arith.constant 0 : index
    %c0_6 = arith.constant 0 : index
    %7 = vector.load %arg9[%c0_5, %c0_6] : memref<1x128xf32, #tpu.memory_space<vmem>>, vector<1x128xf32>
    %8 = vector.broadcast %7 : vector<1x128xf32> to vector<8x128xf32>
    %9 = arith.addf %6, %8 : vector<8x128xf32>
    %c0_7 = arith.constant 0 : index
    %c0_8 = arith.constant 0 : index
    %c0_9 = arith.constant 0 : index
    %10 = vector.load %arg5[%c0_7, %c0_8, %c0_9] : memref<1x8x32xf32, #tpu.memory_space<vmem>>, vector<1x8x32xf32>
    %11 = vector.shape_cast %10 : vector<1x8x32xf32> to vector<8x32xf32>
    %c0_10 = arith.constant 0 : index
    %c0_11 = arith.constant 0 : index
    %12 = vector.load %arg10[%c0_10, %c0_11] : memref<32x128xf32, #tpu.memory_space<vmem>>, vector<32x128xf32>
    %cst_12 = arith.constant dense<0.000000e+00> : vector<8x128xf32>
    %13 = tpu.matmul %11, %12, %cst_12 {dimension_numbers = #tpu.dot_dimension_numbers<[1], [0], [0], [1], [0, 0, 1, 1], [], []>} : vector<8x32xf32>, vector<32x128xf32>, vector<8x128xf32> -> vector<8x128xf32>
    %c0_13 = arith.constant 0 : index
    %c0_14 = arith.constant 0 : index
    %14 = vector.load %arg11[%c0_13, %c0_14] : memref<1x128xf32, #tpu.memory_space<vmem>>, vector<1x128xf32>
    %15 = vector.broadcast %14 : vector<1x128xf32> to vector<8x128xf32>
    %16 = arith.addf %13, %15 : vector<8x128xf32>
    %c0_15 = arith.constant 0 : index
    %c0_16 = arith.constant 0 : index
    %17 = vector.load %arg13[%c0_15, %c0_16] : memref<8x128xf32, #tpu.memory_space<vmem>>, vector<8x128xf32>
    %cst_17 = arith.constant dense<0.000000e+00> : vector<8x8xf32>
    %18 = tpu.matmul %17, %9, %cst_17 {dimension_numbers = #tpu.dot_dimension_numbers<[1], [1], [0], [0], [0, 0, 1, 0], [], []>} : vector<8x128xf32>, vector<8x128xf32>, vector<8x8xf32> -> vector<8x8xf32>
    %c0_18 = arith.constant 0 : index
    %c0_19 = arith.constant 0 : index
    %19 = vector.load %arg14[%c0_18, %c0_19] : memref<8x1xf32, #tpu.memory_space<vmem>>, vector<8x1xf32>
    %cst_20 = arith.constant dense<0xFF800000> : vector<8xf32>
    %20 = vector.multi_reduction <maximumf>, %18, %cst_20 [1] : vector<8x8xf32> to vector<8xf32>
    %21 = vector.shape_cast %20 : vector<8xf32> to vector<8x1xf32>
    %22 = arith.maximumf %19, %21 : vector<8x1xf32>
    %c0_21 = arith.constant 0 : index
    %c0_22 = arith.constant 0 : index
    %23 = vector.load %arg14[%c0_21, %c0_22] : memref<8x1xf32, #tpu.memory_space<vmem>>, vector<8x1xf32>
    %24 = arith.subf %23, %22 : vector<8x1xf32>
    %25 = math.exp %24 : vector<8x1xf32>
    %26 = vector.broadcast %22 : vector<8x1xf32> to vector<8x8xf32>
    %27 = arith.subf %18, %26 : vector<8x8xf32>
    %28 = math.exp %27 : vector<8x8xf32>
    %c0_23 = arith.constant 0 : index
    %c0_24 = arith.constant 0 : index
    %29 = vector.load %arg15[%c0_23, %c0_24] : memref<8x1xf32, #tpu.memory_space<vmem>>, vector<8x1xf32>
    %30 = arith.mulf %25, %29 : vector<8x1xf32>
    %cst_25 = arith.constant dense<0.000000e+00> : vector<8xf32>
    %31 = vector.multi_reduction <add>, %28, %cst_25 [1] : vector<8x8xf32> to vector<8xf32>
    %32 = vector.shape_cast %31 : vector<8xf32> to vector<8x1xf32>
    %33 = arith.addf %30, %32 : vector<8x1xf32>
    %c0_26 = arith.constant 0 : index
    %c0_27 = arith.constant 0 : index
    %34 = vector.load %arg15[%c0_26, %c0_27] : memref<8x1xf32, #tpu.memory_space<vmem>>, vector<8x1xf32>
    tpu.vector_store %arg15[%c0_26, %c0_27], %33 {strides = array<i32>} : memref<8x1xf32, #tpu.memory_space<vmem>>, vector<8x1xf32>,
    %c0_28 = arith.constant 0 : index
    %c0_29 = arith.constant 0 : index
    %35 = vector.load %arg16[%c0_28, %c0_29] : memref<8x128xf32, #tpu.memory_space<vmem>>, vector<8x128xf32>
    %36 = vector.broadcast %25 : vector<8x1xf32> to vector<8x128xf32>
    %37 = arith.mulf %36, %35 : vector<8x128xf32>
    %cst_30 = arith.constant dense<0.000000e+00> : vector<8x128xf32>
    %38 = tpu.matmul %28, %16, %cst_30 {dimension_numbers = #tpu.dot_dimension_numbers<[1], [0], [0], [1], [0, 0, 1, 1], [], []>} : vector<8x8xf32>, vector<8x128xf32>, vector<8x128xf32> -> vector<8x128xf32>
    %39 = arith.addf %37, %38 : vector<8x128xf32>
    %c0_31 = arith.constant 0 : index
    %c0_32 = arith.constant 0 : index
    %40 = vector.load %arg16[%c0_31, %c0_32] : memref<8x128xf32, #tpu.memory_space<vmem>>, vector<8x128xf32>
    tpu.vector_store %arg16[%c0_31, %c0_32], %39 {strides = array<i32>} : memref<8x128xf32, #tpu.memory_space<vmem>>, vector<8x128xf32>,
    %c0_33 = arith.constant 0 : index
    %c0_34 = arith.constant 0 : index
    %41 = vector.load %arg14[%c0_33, %c0_34] : memref<8x1xf32, #tpu.memory_space<vmem>>, vector<8x1xf32>
    tpu.vector_store %arg14[%c0_33, %c0_34], %22 {strides = array<i32>} : memref<8x1xf32, #tpu.memory_space<vmem>>, vector<8x1xf32>,
    %c0_i32_35 = arith.constant 0 : i32
    %42 = arith.cmpi eq, %arg2, %c0_i32_35 : i32
    %43 = arith.extui %42 : i1 to i32
    %c0_i32_36 = arith.constant 0 : i32
    %44 = arith.cmpi ne, %43, %c0_i32_36 : i32
    scf.if %44 {
      %c0_37 = arith.constant 0 : index
      %c0_38 = arith.constant 0 : index
      %45 = vector.load %arg15[%c0_37, %c0_38] : memref<8x1xf32, #tpu.memory_space<vmem>>, vector<8x1xf32>
      %46 = tpu.reciprocal %45 {approx = true} : vector<8x1xf32> -> vector<8x1xf32>
      %c0_39 = arith.constant 0 : index
      %c0_40 = arith.constant 0 : index
      %47 = vector.load %arg16[%c0_39, %c0_40] : memref<8x128xf32, #tpu.memory_space<vmem>>, vector<8x128xf32>
      %48 = vector.broadcast %46 : vector<8x1xf32> to vector<8x128xf32>
      %49 = arith.mulf %47, %48 : vector<8x128xf32>
      %c0_41 = arith.constant 0 : index
      %c0_42 = arith.constant 0 : index
      %c0_43 = arith.constant 0 : index
      %50 = vector.load %arg12[%c0_41, %c0_42, %c0_43] : memref<1x8x128xf32, #tpu.memory_space<vmem>>, vector<1x8x128xf32>
      %51 = vector.shape_cast %50 : vector<1x8x128xf32> to vector<8x128xf32>
      %52 = vector.shape_cast %49 : vector<8x128xf32> to vector<1x8x128xf32>
      tpu.vector_store %arg12[%c0_41, %c0_42, %c0_43], %52 {strides = array<i32>} : memref<1x8x128xf32, #tpu.memory_space<vmem>>, vector<1x8x128xf32>,
    } else {
    }
    return
  }
  func.func @transform_0(%arg0: i32, %arg1: i32, %arg2: i32) -> (i32, i32, i32) {
    %c0_i32 = arith.constant 0 : i32
    %c0_i32_0 = arith.constant 0 : i32
    return %arg0, %arg1, %c0_i32 : i32, i32, i32
  }
  func.func @transform_1(%arg0: i32, %arg1: i32, %arg2: i32) -> (i32, i32, i32) {
    %c0_i32 = arith.constant 0 : i32
    %c0_i32_0 = arith.constant 0 : i32
    return %arg0, %arg2, %c0_i32 : i32, i32, i32
  }
  func.func @transform_2(%arg0: i32, %arg1: i32, %arg2: i32) -> (i32, i32, i32) {
    %c0_i32 = arith.constant 0 : i32
    %c0_i32_0 = arith.constant 0 : i32
    return %arg0, %arg2, %c0_i32 : i32, i32, i32
  }
  func.func @transform_3(%arg0: i32, %arg1: i32, %arg2: i32) -> (i32, i32) {
    %c0_i32 = arith.constant 0 : i32
    %c0_i32_0 = arith.constant 0 : i32
    %c0_i32_1 = arith.constant 0 : i32
    return %c0_i32, %c0_i32_0 : i32, i32
  }
  func.func @transform_4(%arg0: i32, %arg1: i32, %arg2: i32) -> (i32, i32) {
    %c0_i32 = arith.constant 0 : i32
    %c0_i32_0 = arith.constant 0 : i32
    %c0_i32_1 = arith.constant 0 : i32
    return %c0_i32, %c0_i32_0 : i32, i32
  }
  func.func @transform_5(%arg0: i32, %arg1: i32, %arg2: i32) -> (i32, i32) {
    %c0_i32 = arith.constant 0 : i32
    %c0_i32_0 = arith.constant 0 : i32
    %c0_i32_1 = arith.constant 0 : i32
    return %c0_i32, %c0_i32_0 : i32, i32
  }
  func.func @transform_6(%arg0: i32, %arg1: i32, %arg2: i32) -> (i32, i32) {
    %c0_i32 = arith.constant 0 : i32
    %c0_i32_0 = arith.constant 0 : i32
    %c0_i32_1 = arith.constant 0 : i32
    return %c0_i32, %c0_i32_0 : i32, i32
  }
  func.func @transform_7(%arg0: i32, %arg1: i32, %arg2: i32) -> (i32, i32) {
    %c0_i32 = arith.constant 0 : i32
    %c0_i32_0 = arith.constant 0 : i32
    %c0_i32_1 = arith.constant 0 : i32
    return %c0_i32, %c0_i32_0 : i32, i32
  }
  func.func @transform_8(%arg0: i32, %arg1: i32, %arg2: i32) -> (i32, i32) {
    %c0_i32 = arith.constant 0 : i32
    %c0_i32_0 = arith.constant 0 : i32
    %c0_i32_1 = arith.constant 0 : i32
    return %c0_i32, %c0_i32_0 : i32, i32
  }
  func.func @transform_9(%arg0: i32, %arg1: i32, %arg2: i32) -> (i32, i32, i32) {
    %c0_i32 = arith.constant 0 : i32
    %c0_i32_0 = arith.constant 0 : i32
    return %arg0, %arg1, %c0_i32 : i32, i32, i32
  }
}

</mosaic_0001>

<llo_original>
// kernel: tpu_custom_call.1
$region0: #{tpu_custom_call.1}
  #allocation0 [shape = 'u32[]', space=smem, size = 0x4, offset = 0x4, fixed_abs, tag = 'smem constant byte address 0x4 - core index']
  #allocation1 [shape = 'u32[144,128]{1,0:T(1,128)}', space=vmem, size = 0x12000, scoped, tag = 'internal scratch']
  #allocation2 [shape = 'f32[8,128]{1,0:T(8,128)}', space=vmem, size = 0x1000, scoped, tag = 'scratch operand']
  #allocation3 [shape = 'f32[8,1]{1,0:T(8,128)}', space=vmem, size = 0x1000, scoped, tag = 'scratch operand']
  #allocation4 [shape = 'f32[8,1]{1,0:T(8,128)}', space=vmem, size = 0x1000, scoped, tag = 'scratch operand']
  #allocation5 [shape = 'f32[8,128]{1,0:T(8,128)}', space=vmem, size = 0x1000, scoped, tag = 'scratch operand']
  %s0 = inlined_call_operand.hbm [shape: f32[2,8,32], index: 0, kind: input, shape index: {}]
  %s1 = inlined_call_operand.hbm [shape: f32[2,8,32], index: 1, kind: input, shape index: {}]
  %s2 = inlined_call_operand.hbm [shape: f32[2,8,32], index: 2, kind: input, shape index: {}]
  %s3 = inlined_call_operand.hbm [shape: f32[32,128], index: 3, kind: input, shape index: {}]
  %s4 = inlined_call_operand.vmem [shape: f32[1,128], index: 4, kind: input, shape index: {}]
  %s5 = inlined_call_operand.hbm [shape: f32[32,128], index: 5, kind: input, shape index: {}]
  %s6 = inlined_call_operand.vmem [shape: f32[1,128], index: 6, kind: input, shape index: {}]
  %s7 = inlined_call_operand.hbm [shape: f32[32,128], index: 7, kind: input, shape index: {}]
  %s8 = inlined_call_operand.vmem [shape: f32[1,128], index: 8, kind: input, shape index: {}]
  %s9 = inlined_call_operand.hbm [shape: f32[2,8,128], index: 9, kind: output, shape index: {}]
  %s10 = sld [smem:[#allocation0]]
  $region101: #{tpu_custom_call.1} parent=0
    _
  %s12 = ssub.s32 1, %s10
  %s13 = scalar_select 0, %s12, %s10
  $region1: #{tpu_custom_call.1} parent=0
    #allocation6 [shape = 'u8[8192]{0}', space=vmem, size = 0x2000, scoped, tag = 'input window, operand 0']
    #allocation7 [shape = 's32[2]{0}', space=sflag, size = 0x8, scoped, tag = 'scoped memory for tpu_custom_call.1']
    #allocation8 [shape = 's32[2]{0}', space=sflag, size = 0x8, scoped, tag = 'scoped memory for tpu_custom_call.1']
    #allocation9 [shape = 'u8[8192]{0}', space=vmem, size = 0x2000, scoped, tag = 'input window, operand 1']
    #allocation10 [shape = 's32[2]{0}', space=sflag, size = 0x8, scoped, tag = 'scoped memory for tpu_custom_call.1']
    #allocation11 [shape = 'u8[8192]{0}', space=vmem, size = 0x2000, scoped, tag = 'input window, operand 2']
    #allocation12 [shape = 'u8[16384]{0}', space=vmem, size = 0x4000, scoped, tag = 'input window, operand 3, single buffered']
    #allocation13 [shape = 's32[1]{0}', space=sflag, size = 0x4, scoped, tag = 'scoped memory for tpu_custom_call.1']
    #allocation14 [shape = 'u8[16384]{0}', space=vmem, size = 0x4000, scoped, tag = 'input window, operand 5, single buffered']
    #allocation15 [shape = 'u8[16384]{0}', space=vmem, size = 0x4000, scoped, tag = 'input window, operand 7, single buffered']
    #allocation16 [shape = 's32[1]{0}', space=sflag, size = 0x4, scoped, tag = 'scoped memory for tpu_custom_call.1']
    #allocation17 [shape = 'u8[8192]{0}', space=vmem, size = 0x2000, scoped, tag = 'output window, operand 0']
    %14 = vsyncpa [#allocation7], 0
    %s15 = scalar_lea.sflag [#allocation7], 1
    %16 = vsyncpa %s15, 0
    %17 = vsyncpa [#allocation10], 0
    %s18 = scalar_lea.sflag [#allocation10], 1
    %19 = vsyncpa %s18, 0
    %20 = vsyncpa [#allocation13], 0
    %21 = vsyncpa [#allocation16], 0
    %22 = vsyncpa [#allocation8], 0
    %s23 = scalar_lea.sflag [#allocation8], 1
    %24 = vsyncpa %s23, 0
    loop: start=0, step=1, limit=4
    $region2: #{tpu_custom_call.1} parent=1 // loop_pre_header
      _
    $region3: #{tpu_custom_call.1} parent=1 // loop_header
      %s26 = sphi 0, %s30
      %p27 = scmp.ge.s32.totalorder %s26, 4
      %s33 = sphi 0, %s52
      %s34 = sphi 0, %s48
      %s35 = sphi 0, %s44
      %s36 = sphi 0, %s33
      %s37 = sphi 0, %s34
      %s38 = sphi 0, %s35
      %s39 = sphi 0, %s36
      %s40 = sphi 0, %s37
      %s41 = sphi 0, %s38
      %s57 = sphi 0, %s59
      %s60 = sphi 0, %s57
      %s61 = sphi 0, %s60
      %s77 = sphi 0, %s61
      %s85 = sphi 0, %s87
      %s88 = sphi 0, %s85
      %s89 = sphi 0, %s88
      %s105 = sphi 0, %s89
      %s113 = sphi 0, %s115
      %s116 = sphi 0, %s113
      %s117 = sphi 0, %s116
      %s133 = sphi 0, %s117
      %s137 = sphi 0, %s137
      %s139 = sphi 0, %s137
      %s140 = sphi 0, %s139
      %s154 = sphi 0, %s140
      %s158 = sphi 0, %s158
      %s160 = sphi 0, %s158
      %s161 = sphi 0, %s160
      %s175 = sphi 0, %s161
      %s179 = sphi 0, %s179
      %s181 = sphi 0, %s179
      %s182 = sphi 0, %s181
      %s196 = sphi 0, %s182
      %s200 = sphi 0, %s200
      %s202 = sphi 0, %s200
      %s203 = sphi 0, %s202
      %s217 = sphi 0, %s203
      %s221 = sphi 0, %s221
      %s223 = sphi 0, %s221
      %s224 = sphi 0, %s223
      %s238 = sphi 0, %s224
      %s242 = sphi 0, %s242
      %s244 = sphi 0, %s242
      %s245 = sphi 0, %s244
      %s259 = sphi 0, %s245
      %s267 = sphi 0, %s269
      %s270 = sphi 0, %s267
      %s271 = sphi 0, %s270
      %s287 = sphi 0, %s271
    $region4: #{tpu_custom_call.1} parent=1 // loop_header_branch
      %29 = sbr.rel (%p27) target = $region8
    $region5: #{tpu_custom_call.1} parent=1 // loop_body
      %s31 = ssub.s32 %s26, 1
      %s32 = ssub.s32 %s26, 2
      %s42 = sadd.s32 1, %s35
      %p43 = scmp.ge.s32.totalorder %s42, 1
      %s44 = scalar_select %p43, 0, %s42
      %s45 = sadd.s32 1, %s34
      %s46 = scalar_select %p43, %s45, %s34
      %p47 = scmp.ge.s32.totalorder %s46, 1
      %s48 = scalar_select %p47, 0, %s46
      %s49 = sadd.s32 1, %s33
      %s50 = scalar_select %p47, %s49, %s33
      %p51 = scmp.ge.s32.totalorder %s50, 2
      %s52 = scalar_select %p51, 0, %s50
      %s53 = ssub.s32 %s33, %s52
      %s54 = ssub.s32 %s34, %s48
      %s55 = sor.u32 %s53, %s54
      %p56 = scmp.eq.s32.totalorder %s55, 0
      %s58 = sadd.s32 %s57, 1
      %s59 = scalar_select %p56, %s57, %s58
      %p62 = pneg %p56
      %p63 = scmp.eq.s32.totalorder %s26, 1
      %p64 = por %p62, %p63
      %p65 = scmp.ne.s32.totalorder %s57, %s60
      %p66 = scmp.eq.s32.totalorder %s26, 0
      %p67 = por %p65, %p66
      %p68 = scmp.ne.s32.totalorder %s57, %s60
      %p69 = scmp.eq.s32.totalorder %s31, 1
      %p70 = por %p68, %p69
      %p71 = scmp.ne.s32.totalorder %s60, %s61
      %p72 = scmp.eq.s32.totalorder %s31, 0
      %p73 = por %p71, %p72
      %p74 = scmp.ne.s32.totalorder %s60, %s61
      %p75 = scmp.eq.s32.totalorder %s32, 1
      %p76 = por %p74, %p75
      %p78 = scmp.ne.s32.totalorder %s61, %s77
      %p79 = scmp.eq.s32.totalorder %s32, 0
      %p80 = por %p78, %p79
      %s81 = ssub.s32 %s33, %s52
      %s82 = ssub.s32 %s35, %s44
      %s83 = sor.u32 %s81, %s82
      %p84 = scmp.eq.s32.totalorder %s83, 0
      %s86 = sadd.s32 %s85, 1
      %s87 = scalar_select %p84, %s85, %s86
      %p90 = pneg %p84
      %p91 = scmp.eq.s32.totalorder %s26, 1
      %p92 = por %p90, %p91
      %p93 = scmp.ne.s32.totalorder %s85, %s88
      %p94 = scmp.eq.s32.totalorder %s26, 0
      %p95 = por %p93, %p94
      %p96 = scmp.ne.s32.totalorder %s85, %s88
      %p97 = scmp.eq.s32.totalorder %s31, 1
      %p98 = por %p96, %p97
      %p99 = scmp.ne.s32.totalorder %s88, %s89
      %p100 = scmp.eq.s32.totalorder %s31, 0
      %p101 = por %p99, %p100
      %p102 = scmp.ne.s32.totalorder %s88, %s89
      %p103 = scmp.eq.s32.totalorder %s32, 1
      %p104 = por %p102, %p103
      %p106 = scmp.ne.s32.totalorder %s89, %s105
      %p107 = scmp.eq.s32.totalorder %s32, 0
      %p108 = por %p106, %p107
      %s109 = ssub.s32 %s33, %s52
      %s110 = ssub.s32 %s35, %s44
      %s111 = sor.u32 %s109, %s110
      %p112 = scmp.eq.s32.totalorder %s111, 0
      %s114 = sadd.s32 %s113, 1
      %s115 = scalar_select %p112, %s113, %s114
      %p118 = pneg %p112
      %p119 = scmp.eq.s32.totalorder %s26, 1
      %p120 = por %p118, %p119
      %p121 = scmp.ne.s32.totalorder %s113, %s116
      %p122 = scmp.eq.s32.totalorder %s26, 0
      %p123 = por %p121, %p122
      %p124 = scmp.ne.s32.totalorder %s113, %s116
      %p125 = scmp.eq.s32.totalorder %s31, 1
      %p126 = por %p124, %p125
      %p127 = scmp.ne.s32.totalorder %s116, %s117
      %p128 = scmp.eq.s32.totalorder %s31, 0
      %p129 = por %p127, %p128
      %p130 = scmp.ne.s32.totalorder %s116, %s117
      %p131 = scmp.eq.s32.totalorder %s32, 1
      %p132 = por %p130, %p131
      %p134 = scmp.ne.s32.totalorder %s117, %s133
      %p135 = scmp.eq.s32.totalorder %s32, 0
      %p136 = por %p134, %p135
      %s138 = sadd.s32 %s137, 1
      %p141 = scmp.eq.s32.totalorder %s26, 1
      %p142 = scmp.ne.s32.totalorder %s137, %s139
      %p143 = scmp.eq.s32.totalorder %s26, 0
      %p144 = por %p142, %p143
      %p145 = scmp.ne.s32.totalorder %s137, %s139
      %p146 = scmp.eq.s32.totalorder %s31, 1
      %p147 = por %p145, %p146
      %p148 = scmp.ne.s32.totalorder %s139, %s140
      %p149 = scmp.eq.s32.totalorder %s31, 0
      %p150 = por %p148, %p149
      %p151 = scmp.ne.s32.totalorder %s139, %s140
      %p152 = scmp.eq.s32.totalorder %s32, 1
      %p153 = por %p151, %p152
      %p155 = scmp.ne.s32.totalorder %s140, %s154
      %p156 = scmp.eq.s32.totalorder %s32, 0
      %p157 = por %p155, %p156
      %s159 = sadd.s32 %s158, 1
      %p162 = scmp.eq.s32.totalorder %s26, 1
      %p163 = scmp.ne.s32.totalorder %s158, %s160
      %p164 = scmp.eq.s32.totalorder %s26, 0
      %p165 = por %p163, %p164
      %p166 = scmp.ne.s32.totalorder %s158, %s160
      %p167 = scmp.eq.s32.totalorder %s31, 1
      %p168 = por %p166, %p167
      %p169 = scmp.ne.s32.totalorder %s160, %s161
      %p170 = scmp.eq.s32.totalorder %s31, 0
      %p171 = por %p169, %p170
      %p172 = scmp.ne.s32.totalorder %s160, %s161
      %p173 = scmp.eq.s32.totalorder %s32, 1
      %p174 = por %p172, %p173
      %p176 = scmp.ne.s32.totalorder %s161, %s175
      %p177 = scmp.eq.s32.totalorder %s32, 0
      %p178 = por %p176, %p177
      %s180 = sadd.s32 %s179, 1
      %p183 = scmp.eq.s32.totalorder %s26, 1
      %p184 = scmp.ne.s32.totalorder %s179, %s181
      %p185 = scmp.eq.s32.totalorder %s26, 0
      %p186 = por %p184, %p185
      %p187 = scmp.ne.s32.totalorder %s179, %s181
      %p188 = scmp.eq.s32.totalorder %s31, 1
      %p189 = por %p187, %p188
      %p190 = scmp.ne.s32.totalorder %s181, %s182
      %p191 = scmp.eq.s32.totalorder %s31, 0
      %p192 = por %p190, %p191
      %p193 = scmp.ne.s32.totalorder %s181, %s182
      %p194 = scmp.eq.s32.totalorder %s32, 1
      %p195 = por %p193, %p194
      %p197 = scmp.ne.s32.totalorder %s182, %s196
      %p198 = scmp.eq.s32.totalorder %s32, 0
      %p199 = por %p197, %p198
      %s201 = sadd.s32 %s200, 1
      %p204 = scmp.eq.s32.totalorder %s26, 1
      %p205 = scmp.ne.s32.totalorder %s200, %s202
      %p206 = scmp.eq.s32.totalorder %s26, 0
      %p207 = por %p205, %p206
      %p208 = scmp.ne.s32.totalorder %s200, %s202
      %p209 = scmp.eq.s32.totalorder %s31, 1
      %p210 = por %p208, %p209
      %p211 = scmp.ne.s32.totalorder %s202, %s203
      %p212 = scmp.eq.s32.totalorder %s31, 0
      %p213 = por %p211, %p212
      %p214 = scmp.ne.s32.totalorder %s202, %s203
      %p215 = scmp.eq.s32.totalorder %s32, 1
      %p216 = por %p214, %p215
      %p218 = scmp.ne.s32.totalorder %s203, %s217
      %p219 = scmp.eq.s32.totalorder %s32, 0
      %p220 = por %p218, %p219
      %s222 = sadd.s32 %s221, 1
      %p225 = scmp.eq.s32.totalorder %s26, 1
      %p226 = scmp.ne.s32.totalorder %s221, %s223
      %p227 = scmp.eq.s32.totalorder %s26, 0
      %p228 = por %p226, %p227
      %p229 = scmp.ne.s32.totalorder %s221, %s223
      %p230 = scmp.eq.s32.totalorder %s31, 1
      %p231 = por %p229, %p230
      %p232 = scmp.ne.s32.totalorder %s223, %s224
      %p233 = scmp.eq.s32.totalorder %s31, 0
      %p234 = por %p232, %p233
      %p235 = scmp.ne.s32.totalorder %s223, %s224
      %p236 = scmp.eq.s32.totalorder %s32, 1
      %p237 = por %p235, %p236
      %p239 = scmp.ne.s32.totalorder %s224, %s238
      %p240 = scmp.eq.s32.totalorder %s32, 0
      %p241 = por %p239, %p240
      %s243 = sadd.s32 %s242, 1
      %p246 = scmp.eq.s32.totalorder %s26, 1
      %p247 = scmp.ne.s32.totalorder %s242, %s244
      %p248 = scmp.eq.s32.totalorder %s26, 0
      %p249 = por %p247, %p248
      %p250 = scmp.ne.s32.totalorder %s242, %s244
      %p251 = scmp.eq.s32.totalorder %s31, 1
      %p252 = por %p250, %p251
      %p253 = scmp.ne.s32.totalorder %s244, %s245
      %p254 = scmp.eq.s32.totalorder %s31, 0
      %p255 = por %p253, %p254
      %p256 = scmp.ne.s32.totalorder %s244, %s245
      %p257 = scmp.eq.s32.totalorder %s32, 1
      %p258 = por %p256, %p257
      %p260 = scmp.ne.s32.totalorder %s245, %s259
      %p261 = scmp.eq.s32.totalorder %s32, 0
      %p262 = por %p260, %p261
      %s263 = ssub.s32 %s33, %s52
      %s264 = ssub.s32 %s34, %s48
      %s265 = sor.u32 %s263, %s264
      %p266 = scmp.eq.s32.totalorder %s265, 0
      %s268 = sadd.s32 %s267, 1
      %s269 = scalar_select %p266, %s267, %s268
      %p272 = pneg %p266
      %p273 = scmp.eq.s32.totalorder %s26, 1
      %p274 = por %p272, %p273
      %p275 = scmp.ne.s32.totalorder %s267, %s270
      %p276 = scmp.eq.s32.totalorder %s26, 0
      %p277 = por %p275, %p276
      %p278 = scmp.ne.s32.totalorder %s267, %s270
      %p279 = scmp.eq.s32.totalorder %s31, 1
      %p280 = por %p278, %p279
      %p281 = scmp.ne.s32.totalorder %s270, %s271
      %p282 = scmp.eq.s32.totalorder %s31, 0
      %p283 = por %p281, %p282
      %p284 = scmp.ne.s32.totalorder %s270, %s271
      %p285 = scmp.eq.s32.totalorder %s32, 1
      %p286 = por %p284, %p285
      %p288 = scmp.ne.s32.totalorder %s271, %s287
      %p289 = scmp.eq.s32.totalorder %s32, 0
      %p290 = por %p288, %p289
      %p291 = scmp.le.s32.totalorder 1, %s26
      %p292 = scmp.lt.s32.totalorder %s26, 3
      %p293 = pnand %p291, %p292
      %p294 = pneg %p293
      // Predicated region
      $region9: #{tpu_custom_call.1} parent=5 // pred_check
        _
      $region10: #{tpu_custom_call.1} parent=5 // pred_check_branch
        %296 = sbr.rel (%p293) target = $region12
      $region11: #{tpu_custom_call.1} parent=5 // pred_region
        %s297 = ssub.s32 %s26, 1
        // Predicated region
        $region13: #{tpu_custom_call.1} parent=11 // pred_check
          %p298 = pneg %p150
        $region14: #{tpu_custom_call.1} parent=11 // pred_check_branch
          %300 = sbr.rel (%p298) target = $region16
        $region15: #{tpu_custom_call.1} parent=11 // pred_region
          %s302 = ssub.s32 512, 512
          %303 = vsyncadd [#allocation13], %s302
          %s304 = sshll.u32 [#allocation12], 4
          %s305 = int_to_ptr.vmem [resolvable:$true] %s304
          %310 = dma.hbm_to_vmem [thread:$0]  %s3, 512, %s305, [#allocation13], 128, 128, 8
        $region16: #{tpu_custom_call.1} parent=11 // pred_fallthru
          _
        // Predicated region
        $region17: #{tpu_custom_call.1} parent=11 // pred_check
          %p311 = pneg %p171
        $region18: #{tpu_custom_call.1} parent=11 // pred_check_branch
          %313 = sbr.rel (%p311) target = $region20
        $region19: #{tpu_custom_call.1} parent=11 // pred_region
          _
        $region20: #{tpu_custom_call.1} parent=11 // pred_fallthru
          _
        // Predicated region
        $region21: #{tpu_custom_call.1} parent=11 // pred_check
          %p314 = pneg %p192
        $region22: #{tpu_custom_call.1} parent=11 // pred_check_branch
          %316 = sbr.rel (%p314) target = $region24
        $region23: #{tpu_custom_call.1} parent=11 // pred_region
          %s318 = ssub.s32 512, 512
          %319 = vsyncadd [#allocation13], %s318
          %s320 = sshll.u32 [#allocation14], 4
          %s321 = int_to_ptr.vmem [resolvable:$true] %s320
          %326 = dma.hbm_to_vmem [thread:$0]  %s5, 512, %s321, [#allocation13], 128, 128, 8
        $region24: #{tpu_custom_call.1} parent=11 // pred_fallthru
          _
        // Predicated region
        $region25: #{tpu_custom_call.1} parent=11 // pred_check
          %p327 = pneg %p213
        $region26: #{tpu_custom_call.1} parent=11 // pred_check_branch
          %329 = sbr.rel (%p327) target = $region28
        $region27: #{tpu_custom_call.1} parent=11 // pred_region
          _
        $region28: #{tpu_custom_call.1} parent=11 // pred_fallthru
          _
        // Predicated region
        $region29: #{tpu_custom_call.1} parent=11 // pred_check
          %p330 = pneg %p234
        $region30: #{tpu_custom_call.1} parent=11 // pred_check_branch
          %332 = sbr.rel (%p330) target = $region32
        $region31: #{tpu_custom_call.1} parent=11 // pred_region
          %s334 = ssub.s32 512, 512
          %335 = vsyncadd [#allocation16], %s334
          %s336 = sshll.u32 [#allocation15], 4
          %s337 = int_to_ptr.vmem [resolvable:$true] %s336
          %342 = dma.hbm_to_vmem [thread:$0]  %s7, 512, %s337, [#allocation16], 128, 128, 8
        $region32: #{tpu_custom_call.1} parent=11 // pred_fallthru
          _
        // Predicated region
        $region33: #{tpu_custom_call.1} parent=11 // pred_check
          %p343 = pneg %p255
        $region34: #{tpu_custom_call.1} parent=11 // pred_check_branch
          %345 = sbr.rel (%p343) target = $region36
        $region35: #{tpu_custom_call.1} parent=11 // pred_region
          _
        $region36: #{tpu_custom_call.1} parent=11 // pred_fallthru
          _
      $region12: #{tpu_custom_call.1} parent=5 // pred_fallthru
        _
      %p346 = scmp.lt.s32.totalorder %s26, 2
      // Predicated region
      $region37: #{tpu_custom_call.1} parent=5 // pred_check
        %p347 = pneg %p346
      $region38: #{tpu_custom_call.1} parent=5 // pred_check_branch
        %349 = sbr.rel (%p347) target = $region40
      $region39: #{tpu_custom_call.1} parent=5 // pred_region
        // Predicated region
        $region41: #{tpu_custom_call.1} parent=39 // pred_check
          %p350 = pneg %p67
        $region42: #{tpu_custom_call.1} parent=39 // pred_check_branch
          %352 = sbr.rel (%p350) target = $region44
        $region43: #{tpu_custom_call.1} parent=39 // pred_region
          %s353 = sand.u32 %s57, 1
          %s354 = scalar_lea.sflag [#allocation7], %s353
          %s355 = sand.u32 %s57, 1
          %s356 = smul.addr %s355, 8
          %s357 = scalar_lea.vmem [#allocation6], %s356
          %s359 = ssub.s32 128, 128
          %360 = vsyncadd %s354, %s359
          %s361 = sadd.s32 %s34, %s33
          %s362 = smul.addr %s361, 128
          %s363 = scalar_lea.hbm %s0, %s362
          %s365 = sshll.u32 %s357, 4
          %s366 = int_to_ptr.vmem [resolvable:$true] %s365
          %368 = dma.hbm_to_vmem [thread:$0]  %s363, 128, %s366, %s354
        $region44: #{tpu_custom_call.1} parent=39 // pred_fallthru
          _
        // Predicated region
        $region45: #{tpu_custom_call.1} parent=39 // pred_check
          %p369 = pneg %p95
        $region46: #{tpu_custom_call.1} parent=39 // pred_check_branch
          %371 = sbr.rel (%p369) target = $region48
        $region47: #{tpu_custom_call.1} parent=39 // pred_region
          %s372 = sand.u32 %s26, 1
          %s373 = scalar_lea.sflag [#allocation10], %s372
          %s374 = sand.u32 %s85, 1
          %s375 = smul.addr %s374, 8
          %s376 = scalar_lea.vmem [#allocation9], %s375
          %s378 = ssub.s32 128, 128
          %379 = vsyncadd %s373, %s378
          %s380 = sadd.s32 %s35, %s33
          %s381 = smul.addr %s380, 128
          %s382 = scalar_lea.hbm %s1, %s381
          %s384 = sshll.u32 %s376, 4
          %s385 = int_to_ptr.vmem [resolvable:$true] %s384
          %387 = dma.hbm_to_vmem [thread:$0]  %s382, 128, %s385, %s373
        $region48: #{tpu_custom_call.1} parent=39 // pred_fallthru
          _
        // Predicated region
        $region49: #{tpu_custom_call.1} parent=39 // pred_check
          %p388 = pneg %p123
        $region50: #{tpu_custom_call.1} parent=39 // pred_check_branch
          %390 = sbr.rel (%p388) target = $region52
        $region51: #{tpu_custom_call.1} parent=39 // pred_region
          %s391 = sand.u32 %s26, 1
          %s392 = scalar_lea.sflag [#allocation10], %s391
          %s393 = sand.u32 %s113, 1
          %s394 = smul.addr %s393, 8
          %s395 = scalar_lea.vmem [#allocation11], %s394
          %s397 = ssub.s32 128, 128
          %398 = vsyncadd %s392, %s397
          %s399 = sadd.s32 %s35, %s33
          %s400 = smul.addr %s399, 128
          %s401 = scalar_lea.hbm %s2, %s400
          %s403 = sshll.u32 %s395, 4
          %s404 = int_to_ptr.vmem [resolvable:$true] %s403
          %406 = dma.hbm_to_vmem [thread:$0]  %s401, 128, %s404, %s392
        $region52: #{tpu_custom_call.1} parent=39 // pred_fallthru
          _
      $region40: #{tpu_custom_call.1} parent=5 // pred_fallthru
        _
      %p407 = scmp.le.s32.totalorder 1, %s26
      %p408 = scmp.lt.s32.totalorder %s26, 3
      %p409 = pnand %p407, %p408
      %p410 = pneg %p409
      // Predicated region
      $region53: #{tpu_custom_call.1} parent=5 // pred_check
        _
      $region54: #{tpu_custom_call.1} parent=5 // pred_check_branch
        %412 = sbr.rel (%p409) target = $region56
      $region55: #{tpu_custom_call.1} parent=5 // pred_region
        %s413 = ssub.s32 %s26, 1
        %s414 = sand.u32 %s60, 1
        %s415 = scalar_lea.sflag [#allocation7], %s414
        %s416 = sand.u32 %s60, 1
        %s417 = smul.addr %s416, 8
        %s418 = scalar_lea.vmem [#allocation6], %s417
        // Predicated region
        $region57: #{tpu_custom_call.1} parent=55 // pred_check
          %p419 = pneg %p73
        $region58: #{tpu_custom_call.1} parent=55 // pred_check_branch
          %421 = sbr.rel (%p419) target = $region60
        $region59: #{tpu_custom_call.1} parent=55 // pred_region
          %422 = dma.done %s415, 128
        $region60: #{tpu_custom_call.1} parent=55 // pred_fallthru
          _
        %s423 = sand.u32 %s31, 1
        %s424 = scalar_lea.sflag [#allocation10], %s423
        %s425 = sand.u32 %s88, 1
        %s426 = smul.addr %s425, 8
        %s427 = scalar_lea.vmem [#allocation9], %s426
        // Predicated region
        $region61: #{tpu_custom_call.1} parent=55 // pred_check
          %p428 = pneg %p101
        $region62: #{tpu_custom_call.1} parent=55 // pred_check_branch
          %430 = sbr.rel (%p428) target = $region64
        $region63: #{tpu_custom_call.1} parent=55 // pred_region
          %431 = dma.done %s424, 128
        $region64: #{tpu_custom_call.1} parent=55 // pred_fallthru
          _
        %s432 = sand.u32 %s31, 1
        %s433 = scalar_lea.sflag [#allocation10], %s432
        %s434 = sand.u32 %s116, 1
        %s435 = smul.addr %s434, 8
        %s436 = scalar_lea.vmem [#allocation11], %s435
        // Predicated region
        $region65: #{tpu_custom_call.1} parent=55 // pred_check
          %p437 = pneg %p129
        $region66: #{tpu_custom_call.1} parent=55 // pred_check_branch
          %439 = sbr.rel (%p437) target = $region68
        $region67: #{tpu_custom_call.1} parent=55 // pred_region
          %440 = dma.done %s433, 128
        $region68: #{tpu_custom_call.1} parent=55 // pred_fallthru
          _
        // Predicated region
        $region69: #{tpu_custom_call.1} parent=55 // pred_check
          %p441 = pneg %p150
        $region70: #{tpu_custom_call.1} parent=55 // pred_check_branch
          %443 = sbr.rel (%p441) target = $region72
        $region71: #{tpu_custom_call.1} parent=55 // pred_region
          %444 = dma.done [#allocation13], 512
        $region72: #{tpu_custom_call.1} parent=55 // pred_fallthru
          _
        // Predicated region
        $region73: #{tpu_custom_call.1} parent=55 // pred_check
          %p445 = pneg %p192
        $region74: #{tpu_custom_call.1} parent=55 // pred_check_branch
          %447 = sbr.rel (%p445) target = $region76
        $region75: #{tpu_custom_call.1} parent=55 // pred_region
          %448 = dma.done [#allocation13], 512
        $region76: #{tpu_custom_call.1} parent=55 // pred_fallthru
          _
        // Predicated region
        $region77: #{tpu_custom_call.1} parent=55 // pred_check
          %p449 = pneg %p234
        $region78: #{tpu_custom_call.1} parent=55 // pred_check_branch
          %451 = sbr.rel (%p449) target = $region80
        $region79: #{tpu_custom_call.1} parent=55 // pred_region
          %452 = dma.done [#allocation16], 512
        $region80: #{tpu_custom_call.1} parent=55 // pred_fallthru
          _
        %s453 = sand.u32 %s60, 1
        %s454 = scalar_lea.sflag [#allocation7], %s453
        %s455 = sand.u32 %s60, 1
        %s456 = smul.addr %s455, 8
        %s457 = scalar_lea.vmem [#allocation6], %s456
        %p458 = pneg %p73
        %p459 = pneg %p70
        %s460 = sand.u32 %s31, 1
        %s461 = scalar_lea.sflag [#allocation10], %s460
        %s462 = sand.u32 %s88, 1
        %s463 = smul.addr %s462, 8
        %s464 = scalar_lea.vmem [#allocation9], %s463
        %p465 = pneg %p101
        %p466 = pneg %p98
        %s467 = sand.u32 %s31, 1
        %s468 = scalar_lea.sflag [#allocation10], %s467
        %s469 = sand.u32 %s116, 1
        %s470 = smul.addr %s469, 8
        %s471 = scalar_lea.vmem [#allocation11], %s470
        %p472 = pneg %p129
        %p473 = pneg %p126
        %p474 = pneg %p150
        %p475 = pneg %p147
        %p476 = pneg %p171
        %p477 = pneg %p168
        %p478 = pneg %p192
        %p479 = pneg %p189
        %p480 = pneg %p213
        %p481 = pneg %p210
        %p482 = pneg %p234
        %p483 = pneg %p231
        %p484 = pneg %p255
        %p485 = pneg %p252
        %p486 = pneg %p283
        %p487 = pneg %p280
        %s488 = sand.u32 %s270, 1
        %s489 = scalar_lea.sflag [#allocation8], %s488
        %s490 = sand.u32 %s270, 1
        %s491 = smul.addr %s490, 8
        %s492 = scalar_lea.vmem [#allocation17], %s491
        %p493 = scmp.eq.s32.totalorder %s38, 0
        // Predicated region
        $region81: #{tpu_custom_call.1} parent=55 // pred_check
          %p494 = pneg %p493
        $region82: #{tpu_custom_call.1} parent=55 // pred_check_branch
          %496 = sbr.rel (%p494) target = $region84
        $region83: #{tpu_custom_call.1} parent=55 // pred_region
          %v497 = vld [vmem:[%s418] sm:$0xff]
          %v498 = vld [vmem:[#allocation12] sm:$0xff]
          %v499 = vld [vmem:[#allocation12 + $0x8] sm:$0xff]
          %v500 = vld [vmem:[#allocation12 + $0x10] sm:$0xff]
          %v501 = vld [vmem:[#allocation12 + $0x18] sm:$0xff]
          %v502 = vld [vmem:[%s4] sm:$0x1]
          %v504 = vlaneseq
          %v505 = vshrl.u32 %v504, 7
          %v506 = vsub.s32 0, %v505
          %v507 = vrot.slane %v502, %v506
          %vm509 = vcmask 261120
          %v511 = vsel %vm509, %v497, 0
          %513 = vmatprep.subr.mxu0 0.0
          %514 = vmatpush1.msra.mxu0 0.0
          %515 = vmatprep.subr.mxu0 0.0
          %516 = vmatpush1.msra.mxu0 0.0
          %517 = vmatprep.subr.mxu0 0.0
          %518 = vmatpush1.msra.mxu0 0.0
          %519 = vmatprep.subr.mxu0 0.0
          %520 = vmatpush1.msra.mxu0 0.0
          %521 = vmatprep.subr.mxu0 0.0
          %522 = vmatpush1.msra.mxu0 0.0
          %523 = vmatprep.subr.mxu0 0.0
          %524 = vmatpush1.msra.mxu0 0.0
          %525 = vmatprep.subr.mxu0 0.0
          %526 = vmatpush1.msra.mxu0 0.0
          %527 = vmatprep.subr.mxu0 0.0
          %528 = vmatpush1.msra.mxu0 0.0
          %529 = vmatprep.subr.mxu0 0.0
          %530 = vmatpush1.msra.mxu0 0.0
          %531 = vmatprep.subr.mxu0 0.0
          %532 = vmatpush1.msra.mxu0 0.0
          %533 = vmatprep.subr.mxu0 0.0
          %534 = vmatpush1.msra.mxu0 0.0
          %535 = vmatprep.subr.mxu0 0.0
          %536 = vmatpush1.msra.mxu0 0.0
          %537 = vmatprep.subr.mxu0 0.0
          %538 = vmatpush1.msra.mxu0 %v501
          %539 = vmatprep.subr.mxu0 0.0
          %540 = vmatpush1.msra.mxu0 %v500
          %541 = vmatprep.subr.mxu0 0.0
          %542 = vmatpush1.msra.mxu0 %v499
          %543 = vmatprep.subr.mxu0 0.0
          %544 = vmatpush1.msra.mxu0 %v498
          %545 = vmatprep.subr.mxu0 0.0
          %546 = vmatpush2.msra.mxu0 0.0
          %547 = vmatprep.subr.mxu0 0.0
          %548 = vmatpush2.msra.mxu0 0.0
          %549 = vmatprep.subr.mxu0 0.0
          %550 = vmatpush2.msra.mxu0 0.0
          %551 = vmatprep.subr.mxu0 0.0
          %552 = vmatpush2.msra.mxu0 0.0
          %553 = vmatprep.subr.mxu0 0.0
          %554 = vmatpush2.msra.mxu0 0.0
          %555 = vmatprep.subr.mxu0 0.0
          %556 = vmatpush2.msra.mxu0 0.0
          %557 = vmatprep.subr.mxu0 0.0
          %558 = vmatpush2.msra.mxu0 0.0
          %559 = vmatprep.subr.mxu0 0.0
          %560 = vmatpush2.msra.mxu0 0.0
          %561 = vmatprep.subr.mxu0 0.0
          %562 = vmatpush2.msra.mxu0 0.0
          %563 = vmatprep.subr.mxu0 0.0
          %564 = vmatpush2.msra.mxu0 0.0
          %565 = vmatprep.subr.mxu0 0.0
          %566 = vmatpush2.msra.mxu0 0.0
          %567 = vmatprep.subr.mxu0 0.0
          %568 = vmatpush2.msra.mxu0 0.0
          %569 = vmatprep.subr.mxu0 0.0
          %570 = vmatpush2.msra.mxu0 0.0
          %571 = vmatprep.subr.mxu0 0.0
          %572 = vmatpush2.msra.mxu0 0.0
          %573 = vmatprep.subr.mxu0 0.0
          %574 = vmatpush2.msra.mxu0 0.0
          %575 = vmatprep.subr.mxu0 0.0
          %576 = vmatpush2.msra.mxu0 0.0
          %577 = vmatprep.mubr.f32.mxu0 0.0
          %578 = vmatmul.mubr.f32.gmra.mxu0 %v511
          %v579 = vpop.f32.mrf.mxu0
          %v580 = vadd.f32 %v507, %v579
          %v581 = vpop.f32.mrf.mxu0
          %582 = vdwg.mxu0
          %v583 = vmul.f32 %v580, 0.25
          %584 = vst [vmem:[#allocation2] sm:$0xff] %v583
          %vm585 = vcmask 7168
          %586 = vst.msk [vmem:[#allocation3] sm:$0xff] %vm585, -inf
          %587 = vst.msk [vmem:[#allocation4] sm:$0xff] %vm585, 0.0
          %588 = vst [vmem:[#allocation5] sm:$0xff] 0.0
        $region84: #{tpu_custom_call.1} parent=55 // pred_fallthru
          _
        %v589 = vld [vmem:[%s427] sm:$0xff]
        %v590 = vld [vmem:[#allocation14] sm:$0xff]
        %v591 = vld [vmem:[#allocation14 + $0x8] sm:$0xff]
        %v592 = vld [vmem:[#allocation14 + $0x10] sm:$0xff]
        %v593 = vld [vmem:[#allocation14 + $0x18] sm:$0xff]
        %v594 = vld [vmem:[%s6] sm:$0x1]
        %v596 = vlaneseq
        %v597 = vshrl.u32 %v596, 7
        %v598 = vsub.s32 0, %v597
        %v599 = vrot.slane %v594, %v598
        %vm601 = vcmask 261120
        %v603 = vsel %vm601, %v589, 0
        %605 = vmatprep.subr.mxu0 0.0
        %606 = vmatpush1.msra.mxu0 0.0
        %607 = vmatprep.subr.mxu0 0.0
        %608 = vmatpush1.msra.mxu0 0.0
        %609 = vmatprep.subr.mxu0 0.0
        %610 = vmatpush1.msra.mxu0 0.0
        %611 = vmatprep.subr.mxu0 0.0
        %612 = vmatpush1.msra.mxu0 0.0
        %613 = vmatprep.subr.mxu0 0.0
        %614 = vmatpush1.msra.mxu0 0.0
        %615 = vmatprep.subr.mxu0 0.0
        %616 = vmatpush1.msra.mxu0 0.0
        %617 = vmatprep.subr.mxu0 0.0
        %618 = vmatpush1.msra.mxu0 0.0
        %619 = vmatprep.subr.mxu0 0.0
        %620 = vmatpush1.msra.mxu0 0.0
        %621 = vmatprep.subr.mxu0 0.0
        %622 = vmatpush1.msra.mxu0 0.0
        %623 = vmatprep.subr.mxu0 0.0
        %624 = vmatpush1.msra.mxu0 0.0
        %625 = vmatprep.subr.mxu0 0.0
        %626 = vmatpush1.msra.mxu0 0.0
        %627 = vmatprep.subr.mxu0 0.0
        %628 = vmatpush1.msra.mxu0 0.0
        %629 = vmatprep.subr.mxu0 0.0
        %630 = vmatpush1.msra.mxu0 %v593
        %631 = vmatprep.subr.mxu0 0.0
        %632 = vmatpush1.msra.mxu0 %v592
        %633 = vmatprep.subr.mxu0 0.0
        %634 = vmatpush1.msra.mxu0 %v591
        %635 = vmatprep.subr.mxu0 0.0
        %636 = vmatpush1.msra.mxu0 %v590
        %637 = vmatprep.subr.mxu0 0.0
        %638 = vmatpush2.msra.mxu0 0.0
        %639 = vmatprep.subr.mxu0 0.0
        %640 = vmatpush2.msra.mxu0 0.0
        %641 = vmatprep.subr.mxu0 0.0
        %642 = vmatpush2.msra.mxu0 0.0
        %643 = vmatprep.subr.mxu0 0.0
        %644 = vmatpush2.msra.mxu0 0.0
        %645 = vmatprep.subr.mxu0 0.0
        %646 = vmatpush2.msra.mxu0 0.0
        %647 = vmatprep.subr.mxu0 0.0
        %648 = vmatpush2.msra.mxu0 0.0
        %649 = vmatprep.subr.mxu0 0.0
        %650 = vmatpush2.msra.mxu0 0.0
        %651 = vmatprep.subr.mxu0 0.0
        %652 = vmatpush2.msra.mxu0 0.0
        %653 = vmatprep.subr.mxu0 0.0
        %654 = vmatpush2.msra.mxu0 0.0
        %655 = vmatprep.subr.mxu0 0.0
        %656 = vmatpush2.msra.mxu0 0.0
        %657 = vmatprep.subr.mxu0 0.0
        %658 = vmatpush2.msra.mxu0 0.0
        %659 = vmatprep.subr.mxu0 0.0
        %660 = vmatpush2.msra.mxu0 0.0
        %661 = vmatprep.subr.mxu0 0.0
        %662 = vmatpush2.msra.mxu0 0.0
        %663 = vmatprep.subr.mxu0 0.0
        %664 = vmatpush2.msra.mxu0 0.0
        %665 = vmatprep.subr.mxu0 0.0
        %666 = vmatpush2.msra.mxu0 0.0
        %667 = vmatprep.subr.mxu0 0.0
        %668 = vmatpush2.msra.mxu0 0.0
        %669 = vmatprep.mubr.f32.mxu0 0.0
        %670 = vmatmul.mubr.f32.gmra.mxu0 %v603
        %v671 = vpop.f32.mrf.mxu0
        %v672 = vadd.f32 %v599, %v671
        %v673 = vpop.f32.mrf.mxu0
        %674 = vdwg.mxu0
        %v675 = vld [vmem:[%s436] sm:$0xff]
        %v676 = vld [vmem:[#allocation15] sm:$0xff]
        %v677 = vld [vmem:[#allocation15 + $0x8] sm:$0xff]
        %v678 = vld [vmem:[#allocation15 + $0x10] sm:$0xff]
        %v679 = vld [vmem:[#allocation15 + $0x18] sm:$0xff]
        %v680 = vld [vmem:[%s8] sm:$0x1]
        %v682 = vlaneseq
        %v683 = vshrl.u32 %v682, 7
        %v684 = vsub.s32 0, %v683
        %v685 = vrot.slane %v680, %v684
        %v688 = vsel %vm601, %v675, 0
        %690 = vmatprep.subr.mxu0 0.0
        %691 = vmatpush1.msra.mxu0 0.0
        %692 = vmatprep.subr.mxu0 0.0
        %693 = vmatpush1.msra.mxu0 0.0
        %694 = vmatprep.subr.mxu0 0.0
        %695 = vmatpush1.msra.mxu0 0.0
        %696 = vmatprep.subr.mxu0 0.0
        %697 = vmatpush1.msra.mxu0 0.0
        %698 = vmatprep.subr.mxu0 0.0
        %699 = vmatpush1.msra.mxu0 0.0
        %700 = vmatprep.subr.mxu0 0.0
        %701 = vmatpush1.msra.mxu0 0.0
        %702 = vmatprep.subr.mxu0 0.0
        %703 = vmatpush1.msra.mxu0 0.0
        %704 = vmatprep.subr.mxu0 0.0
        %705 = vmatpush1.msra.mxu0 0.0
        %706 = vmatprep.subr.mxu0 0.0
        %707 = vmatpush1.msra.mxu0 0.0
        %708 = vmatprep.subr.mxu0 0.0
        %709 = vmatpush1.msra.mxu0 0.0
        %710 = vmatprep.subr.mxu0 0.0
        %711 = vmatpush1.msra.mxu0 0.0
        %712 = vmatprep.subr.mxu0 0.0
        %713 = vmatpush1.msra.mxu0 0.0
        %714 = vmatprep.subr.mxu0 0.0
        %715 = vmatpush1.msra.mxu0 %v679
        %716 = vmatprep.subr.mxu0 0.0
        %717 = vmatpush1.msra.mxu0 %v678
        %718 = vmatprep.subr.mxu0 0.0
        %719 = vmatpush1.msra.mxu0 %v677
        %720 = vmatprep.subr.mxu0 0.0
        %721 = vmatpush1.msra.mxu0 %v676
        %722 = vmatprep.subr.mxu0 0.0
        %723 = vmatpush2.msra.mxu0 0.0
        %724 = vmatprep.subr.mxu0 0.0
        %725 = vmatpush2.msra.mxu0 0.0
        %726 = vmatprep.subr.mxu0 0.0
        %727 = vmatpush2.msra.mxu0 0.0
        %728 = vmatprep.subr.mxu0 0.0
        %729 = vmatpush2.msra.mxu0 0.0
        %730 = vmatprep.subr.mxu0 0.0
        %731 = vmatpush2.msra.mxu0 0.0
        %732 = vmatprep.subr.mxu0 0.0
        %733 = vmatpush2.msra.mxu0 0.0
        %734 = vmatprep.subr.mxu0 0.0
        %735 = vmatpush2.msra.mxu0 0.0
        %736 = vmatprep.subr.mxu0 0.0
        %737 = vmatpush2.msra.mxu0 0.0
        %738 = vmatprep.subr.mxu0 0.0
        %739 = vmatpush2.msra.mxu0 0.0
        %740 = vmatprep.subr.mxu0 0.0
        %741 = vmatpush2.msra.mxu0 0.0
        %742 = vmatprep.subr.mxu0 0.0
        %743 = vmatpush2.msra.mxu0 0.0
        %744 = vmatprep.subr.mxu0 0.0
        %745 = vmatpush2.msra.mxu0 0.0
        %746 = vmatprep.subr.mxu0 0.0
        %747 = vmatpush2.msra.mxu0 0.0
        %748 = vmatprep.subr.mxu0 0.0
        %749 = vmatpush2.msra.mxu0 0.0
        %750 = vmatprep.subr.mxu0 0.0
        %751 = vmatpush2.msra.mxu0 0.0
        %752 = vmatprep.subr.mxu0 0.0
        %753 = vmatpush2.msra.mxu0 0.0
        %754 = vmatprep.mubr.f32.mxu0 0.0
        %755 = vmatmul.mubr.f32.gmra.mxu0 %v688
        %v756 = vpop.f32.mrf.mxu0
        %v757 = vadd.f32 %v685, %v756
        %v758 = vpop.f32.mrf.mxu0
        %759 = vdwg.mxu0
        %v760 = vld [vmem:[#allocation2] sm:$0xff]
        %761 = vmatprep.subr.mxu0 0.0
        %762 = vmatpush1.xpose.msra.mxu0 0.0
        %763 = vmatprep.subr.mxu0 0.0
        %764 = vmatpush1.xpose.msra.mxu0 0.0
        %765 = vmatprep.subr.mxu0 0.0
        %766 = vmatpush1.xpose.msra.mxu0 0.0
        %767 = vmatprep.subr.mxu0 0.0
        %768 = vmatpush1.xpose.msra.mxu0 0.0
        %769 = vmatprep.subr.mxu0 0.0
        %770 = vmatpush1.xpose.msra.mxu0 0.0
        %771 = vmatprep.subr.mxu0 0.0
        %772 = vmatpush1.xpose.msra.mxu0 0.0
        %773 = vmatprep.subr.mxu0 0.0
        %774 = vmatpush1.xpose.msra.mxu0 0.0
        %775 = vmatprep.subr.mxu0 0.0
        %776 = vmatpush1.xpose.msra.mxu0 0.0
        %777 = vmatprep.subr.mxu0 0.0
        %778 = vmatpush1.xpose.msra.mxu0 0.0
        %779 = vmatprep.subr.mxu0 0.0
        %780 = vmatpush1.xpose.msra.mxu0 0.0
        %781 = vmatprep.subr.mxu0 0.0
        %782 = vmatpush1.xpose.msra.mxu0 0.0
        %783 = vmatprep.subr.mxu0 0.0
        %784 = vmatpush1.xpose.msra.mxu0 0.0
        %785 = vmatprep.subr.mxu0 0.0
        %786 = vmatpush1.xpose.msra.mxu0 0.0
        %787 = vmatprep.subr.mxu0 0.0
        %788 = vmatpush1.xpose.msra.mxu0 0.0
        %789 = vmatprep.subr.mxu0 0.0
        %790 = vmatpush1.xpose.msra.mxu0 0.0
        %791 = vmatprep.subr.mxu0 0.0
        %792 = vmatpush1.xpose.msra.mxu0 %v672
        %793 = vmatprep.subr.mxu0 0.0
        %794 = vmatpush2.xpose.msra.mxu0 0.0
        %795 = vmatprep.subr.mxu0 0.0
        %796 = vmatpush2.xpose.msra.mxu0 0.0
        %797 = vmatprep.subr.mxu0 0.0
        %798 = vmatpush2.xpose.msra.mxu0 0.0
        %799 = vmatprep.subr.mxu0 0.0
        %800 = vmatpush2.xpose.msra.mxu0 0.0
        %801 = vmatprep.subr.mxu0 0.0
        %802 = vmatpush2.xpose.msra.mxu0 0.0
        %803 = vmatprep.subr.mxu0 0.0
        %804 = vmatpush2.xpose.msra.mxu0 0.0
        %805 = vmatprep.subr.mxu0 0.0
        %806 = vmatpush2.xpose.msra.mxu0 0.0
        %807 = vmatprep.subr.mxu0 0.0
        %808 = vmatpush2.xpose.msra.mxu0 0.0
        %809 = vmatprep.subr.mxu0 0.0
        %810 = vmatpush2.xpose.msra.mxu0 0.0
        %811 = vmatprep.subr.mxu0 0.0
        %812 = vmatpush2.xpose.msra.mxu0 0.0
        %813 = vmatprep.subr.mxu0 0.0
        %814 = vmatpush2.xpose.msra.mxu0 0.0
        %815 = vmatprep.subr.mxu0 0.0
        %816 = vmatpush2.xpose.msra.mxu0 0.0
        %817 = vmatprep.subr.mxu0 0.0
        %818 = vmatpush2.xpose.msra.mxu0 0.0
        %819 = vmatprep.subr.mxu0 0.0
        %820 = vmatpush2.xpose.msra.mxu0 0.0
        %821 = vmatprep.subr.mxu0 0.0
        %822 = vmatpush2.xpose.msra.mxu0 0.0
        %823 = vmatprep.subr.mxu0 0.0
        %824 = vmatpush2.xpose.msra.mxu0 0.0
        %825 = vmatprep.mubr.f32.mxu0 0.0
        %826 = vmatmul.mubr.f32.gmra.mxu0 %v760
        %v827 = vpop.f32.mrf.mxu0
        %v828 = vadd.f32 0.0, %v827
        %v829 = vpop.f32.mrf.mxu0
        %830 = vdwg.mxu0
        %v831 = vld [vmem:[#allocation3] sm:$0xff]
        %vm832 = vcmask 64512
        %v833 = vsel %vm832, %v828, -inf
        %834 = vmax.xlane.f32.xlu0 %v833
        %v835 = vpop.xlane.xlu0 %834
        %v836 = vmax.f32 %v831, %v835
        %v837 = vsub.f32 %v831, %v836
        %v838 = vmul.f32 %v837, 1.442695
        %v839 = vpow.pop %v838
        %841 = vset.pattern.permute.xlu0 0
        %842 = vperm.xlu0 %841, %v836
        %v843 = vpop.permute.xlu0 %842
        %v845 = vsub.f32 %v828, %v843
        %v846 = vmul.f32 %v845, 1.442695
        %v847 = vpow.pop %v846
        %v848 = vld [vmem:[#allocation4] sm:$0xff]
        %v849 = vmul.f32 %v839, %v848
        %v850 = vsel %vm832, %v847, 0.0
        %851 = vadd.xlane.f32.xlu0 %v850
        %v852 = vpop.xlane.xlu0 %851
        %v853 = vadd.f32 %v849, %v852
        %vm854 = vcmask 7168
        %855 = vst.msk [vmem:[#allocation4] sm:$0xff] %vm854, %v853
        %v856 = vld [vmem:[#allocation5] sm:$0xff]
        %858 = vset.pattern.permute.xlu0 0
        %859 = vperm.xlu0 %858, %v839
        %v860 = vpop.permute.xlu0 %859
        %v862 = vmul.f32 %v860, %v856
        %v864 = vsel %vm832, %v847, 0
        %866 = vmatprep.subr.mxu0 0.0
        %867 = vmatpush1.msra.mxu0 0.0
        %868 = vmatprep.subr.mxu0 0.0
        %869 = vmatpush1.msra.mxu0 0.0
        %870 = vmatprep.subr.mxu0 0.0
        %871 = vmatpush1.msra.mxu0 0.0
        %872 = vmatprep.subr.mxu0 0.0
        %873 = vmatpush1.msra.mxu0 0.0
        %874 = vmatprep.subr.mxu0 0.0
        %875 = vmatpush1.msra.mxu0 0.0
        %876 = vmatprep.subr.mxu0 0.0
        %877 = vmatpush1.msra.mxu0 0.0
        %878 = vmatprep.subr.mxu0 0.0
        %879 = vmatpush1.msra.mxu0 0.0
        %880 = vmatprep.subr.mxu0 0.0
        %881 = vmatpush1.msra.mxu0 0.0
        %882 = vmatprep.subr.mxu0 0.0
        %883 = vmatpush1.msra.mxu0 0.0
        %884 = vmatprep.subr.mxu0 0.0
        %885 = vmatpush1.msra.mxu0 0.0
        %886 = vmatprep.subr.mxu0 0.0
        %887 = vmatpush1.msra.mxu0 0.0
        %888 = vmatprep.subr.mxu0 0.0
        %889 = vmatpush1.msra.mxu0 0.0
        %890 = vmatprep.subr.mxu0 0.0
        %891 = vmatpush1.msra.mxu0 0.0
        %892 = vmatprep.subr.mxu0 0.0
        %893 = vmatpush1.msra.mxu0 0.0
        %894 = vmatprep.subr.mxu0 0.0
        %895 = vmatpush1.msra.mxu0 0.0
        %896 = vmatprep.subr.mxu0 0.0
        %897 = vmatpush1.msra.mxu0 %v757
        %898 = vmatprep.subr.mxu0 0.0
        %899 = vmatpush2.msra.mxu0 0.0
        %900 = vmatprep.subr.mxu0 0.0
        %901 = vmatpush2.msra.mxu0 0.0
        %902 = vmatprep.subr.mxu0 0.0
        %903 = vmatpush2.msra.mxu0 0.0
        %904 = vmatprep.subr.mxu0 0.0
        %905 = vmatpush2.msra.mxu0 0.0
        %906 = vmatprep.subr.mxu0 0.0
        %907 = vmatpush2.msra.mxu0 0.0
        %908 = vmatprep.subr.mxu0 0.0
        %909 = vmatpush2.msra.mxu0 0.0
        %910 = vmatprep.subr.mxu0 0.0
        %911 = vmatpush2.msra.mxu0 0.0
        %912 = vmatprep.subr.mxu0 0.0
        %913 = vmatpush2.msra.mxu0 0.0
        %914 = vmatprep.subr.mxu0 0.0
        %915 = vmatpush2.msra.mxu0 0.0
        %916 = vmatprep.subr.mxu0 0.0
        %917 = vmatpush2.msra.mxu0 0.0
        %918 = vmatprep.subr.mxu0 0.0
        %919 = vmatpush2.msra.mxu0 0.0
        %920 = vmatprep.subr.mxu0 0.0
        %921 = vmatpush2.msra.mxu0 0.0
        %922 = vmatprep.subr.mxu0 0.0
        %923 = vmatpush2.msra.mxu0 0.0
        %924 = vmatprep.subr.mxu0 0.0
        %925 = vmatpush2.msra.mxu0 0.0
        %926 = vmatprep.subr.mxu0 0.0
        %927 = vmatpush2.msra.mxu0 0.0
        %928 = vmatprep.subr.mxu0 0.0
        %929 = vmatpush2.msra.mxu0 0.0
        %930 = vmatprep.mubr.f32.mxu0 0.0
        %931 = vmatmul.mubr.f32.gmra.mxu0 %v864
        %v932 = vpop.f32.mrf.mxu0
        %v933 = vadd.f32 0.0, %v932
        %v934 = vpop.f32.mrf.mxu0
        %935 = vdwg.mxu0
        %v936 = vadd.f32 %v862, %v933
        %937 = vst [vmem:[#allocation5] sm:$0xff] %v936
        %938 = vst.msk [vmem:[#allocation3] sm:$0xff] %vm854, %v836
        // Predicated region
        $region85: #{tpu_custom_call.1} parent=55 // pred_check
          %p939 = pneg %p493
        $region86: #{tpu_custom_call.1} parent=55 // pred_check_branch
          %941 = sbr.rel (%p939) target = $region88
        $region87: #{tpu_custom_call.1} parent=55 // pred_region
          %v942 = vld [vmem:[#allocation4] sm:$0xff]
          %v943 = vrcp.pop %v942
          %v944 = vld [vmem:[#allocation5] sm:$0xff]
          %946 = vset.pattern.permute.xlu0 0
          %947 = vperm.xlu0 %946, %v943
          %v948 = vpop.permute.xlu0 %947
          %v950 = vmul.f32 %v944, %v948
          %951 = vst [vmem:[%s492] sm:$0xff] %v950
        $region88: #{tpu_custom_call.1} parent=55 // pred_fallthru
          _
        %s952 = sand.u32 %s270, 1
        %s953 = scalar_lea.sflag [#allocation8], %s952
        %s954 = sand.u32 %s270, 1
        %s955 = smul.addr %s954, 8
        %s956 = scalar_lea.vmem [#allocation17], %s955
        // Predicated region
        $region89: #{tpu_custom_call.1} parent=55 // pred_check
          %p957 = pneg %p280
        $region90: #{tpu_custom_call.1} parent=55 // pred_check_branch
          %959 = sbr.rel (%p957) target = $region92
        $region91: #{tpu_custom_call.1} parent=55 // pred_region
          %s961 = ssub.s32 128, 128
          %962 = vsyncadd %s953, %s961
          %s963 = sadd.s32 %s37, %s36
          %s964 = smul.addr %s963, 128
          %s965 = scalar_lea.hbm %s9, %s964
          %s967 = sshll.u32 %s956, 4
          %s968 = int_to_ptr.vmem [resolvable:$true] %s967
          %970 = dma.vmem_to_hbm [thread:$0]  %s968, 128, %s965, %s953
        $region92: #{tpu_custom_call.1} parent=55 // pred_fallthru
          _
      $region56: #{tpu_custom_call.1} parent=5 // pred_fallthru
        _
      %p971 = scmp.le.s32.totalorder 2, %s26
      // Predicated region
      $region93: #{tpu_custom_call.1} parent=5 // pred_check
        %p972 = pneg %p971
      $region94: #{tpu_custom_call.1} parent=5 // pred_check_branch
        %974 = sbr.rel (%p972) target = $region96
      $region95: #{tpu_custom_call.1} parent=5 // pred_region
        %s975 = ssub.s32 %s26, 2
        // Predicated region
        $region97: #{tpu_custom_call.1} parent=95 // pred_check
          %p976 = pneg %p286
        $region98: #{tpu_custom_call.1} parent=95 // pred_check_branch
          %978 = sbr.rel (%p976) target = $region100
        $region99: #{tpu_custom_call.1} parent=95 // pred_region
          %s979 = sand.u32 %s271, 1
          %s980 = scalar_lea.sflag [#allocation8], %s979
          %s981 = sand.u32 %s271, 1
          %s982 = smul.addr %s981, 8
          %s983 = scalar_lea.vmem [#allocation17], %s982
          %984 = dma.done %s980, 128
        $region100: #{tpu_custom_call.1} parent=95 // pred_fallthru
          _
      $region96: #{tpu_custom_call.1} parent=5 // pred_fallthru
        _
    $region6: #{tpu_custom_call.1} parent=1 // loop_footer
      %s30 = sadd.s32 1, %s26
    $region7: #{tpu_custom_call.1} parent=1 // loop_footer_branch
      %25 = sbr.rel target = $region3
    $region8: #{tpu_custom_call.1} parent=1 // loop_exit
      _
    %985 = vsyncpa [#allocation7], 1
    %s986 = scalar_lea.sflag [#allocation7], 1
    %987 = vsyncpa %s986, 1
    %988 = vsyncpa [#allocation10], 1
    %s989 = scalar_lea.sflag [#allocation10], 1
    %990 = vsyncpa %s989, 1
    %991 = vsyncpa [#allocation13], 1
    %992 = vsyncpa [#allocation16], 1
    %993 = vsyncpa [#allocation8], 1
    %s994 = scalar_lea.sflag [#allocation8], 1
    %995 = vsyncpa %s994, 1

</llo_original>
